<compile_context>
chip_gen: v6e
topology: v6e:2x2x1
jax: 0.10.0
libtpu: 0.0.40
codegen_flags: <defaults>
</compile_context>

<pallas_src>
import functools

import jax
import jax.numpy as jnp
import numpy as np
from jax.experimental import pallas as pl
from jax.experimental.pallas import tpu as pltpu

P = 8              # patch size of the stand-in backbone conv (stride-P stage)
FEAT_C = 128       # stand-in for the ResNet layer4 channels (2048 at real scale)
NUM_CLASSES = 1    # module default; head is specialised for 1 class (VPU path)
EPS = 1e-5
LANE = 128
MAX_TM = 2048


def _choose_tiling(m):
    """Pick (tile_m, num_tiles).

    TM is always a multiple of 128 (the (1, 1, TM) output tile is then an
    unmasked lane-dense vst) and capped at 2048 (per-grid-step overhead
    amortised; VMEM budget below still fits v7x's 64 MiB at real FEAT_C).
    num_tiles >= 2 so the "parallel" grid axis can be split across both v7x
    TensorCores and double-buffered pipelining is active.  The caller pads M
    up to tm * num_tiles (at real scale M is usually already divisible, so the
    pad is empty; at toy scale the padded rows are discarded after the call).
    """
    half = pl.cdiv(m, 2)
    tm = min(MAX_TM, max(LANE, LANE * pl.cdiv(half, LANE)))
    num_tiles = max(2, pl.cdiv(m, tm))
    return int(tm), int(num_tiles)


def _patchify(img_nchw, out_dtype):
    """NCHW image -> (N*Hp*Wp, P*P*C) patch matrix, K ordered (pi, pj, c).

    One transpose (single HBM read + single half-width bf16 write when
    out_dtype is bf16); the surrounding reshapes only split/merge contiguous
    dims.  TODO(synk): move this into the kernel via a patch-indexed BlockSpec
    to eliminate the copy entirely.
    """
    n, c, h, w = img_nchw.shape
    hp, wp = h // P, w // P
    t = img_nchw.reshape(n, c, hp, P, wp, P)
    t = jnp.transpose(t, (0, 2, 4, 3, 5, 1)).astype(out_dtype)  # (n,hp,wp,P,P,c)
    return t.reshape(n * hp * wp, P * P * c)


def _pad_rows(xp, m_pad):
    m = xp.shape[0]
    if m_pad == m:
        return xp
    return jnp.pad(xp, ((0, m_pad - m), (0, 0)))


# ----------------------------------------------------------------------------
# Fused kernel: (patch-conv == matmul, BN scale pre-folded into the weight)
# -> +shift -> ReLU for BOTH Siamese branches (shared resident weight), then
# the combination (cat/minus/abs) and the 1x1-conv classifier as a VPU mul +
# single lane reduction (num_classes == 1), stored lane-dense as (1, 1, TM).
# ----------------------------------------------------------------------------
def _fused_siamese_kernel(*refs, combination):
    if combination == 'cat':
        xpy_ref, xpx_ref, w1_ref, shift_ref, wy_ref, wx_ref, feat_ref = refs
    else:
        xpy_ref, xpx_ref, w1_ref, shift_ref, wy_ref, feat_ref = refs
        wx_ref = None

    w1 = w1_ref[...]        # (K, FEAT_C) bf16, BN scale folded, resident in VMEM
    shift = shift_ref[...]  # (1, FEAT_C) f32

    def branch(xp_ref):
        acc = jnp.dot(xp_ref[...], w1, preferred_element_type=jnp.float32)
        return jnp.maximum(acc + shift, 0.0)   # FixedBatchNorm shift + ReLU (f32)

    fy = branch(xpy_ref)    # (TM, FEAT_C) f32
    fx = branch(xpx_ref)
    wy = wy_ref[...]        # (1, FEAT_C) f32

    # 1x1 conv with a single output class: VPU multiply + ONE XLU lane
    # reduction (MXU would use 1 of 128/256 columns and force masked stores).
    if combination == 'cat':
        feats = jnp.sum(fy * wy + fx * wx_ref[...], axis=-1)
    elif combination == 'minus':
        feats = jnp.sum((fy - fx) * wy, axis=-1)
    else:  # 'abs'
        feats = jnp.sum(jnp.abs(fy - fx) * wy, axis=-1)

    # Lane-dense store: (1, 1, TM) with TM (a multiple of 128) on the lane axis.
    feat_ref[...] = feats.reshape(feat_ref.shape).astype(feat_ref.dtype)


def classifier_siamese_forward(x, y, params, combination='cat'):
    """Pallas version of Classifier_Siamese.forward(x, y) -> (logits, features)."""
    n, c, h, w = x.shape
    assert h % P == 0 and w % P == 0
    hp, wp = h // P, w // P
    s = hp * wp
    m = n * s
    k = P * P * c

    assert params['w_cls'].shape[0] == NUM_CLASSES == 1, (
        "head is specialised to num_classes == 1 "
        "(TODO(synk): add an MXU matmul head for num_classes > 1)")

    # bf16 MXU inputs (2x MXU rate, half DMA/VMEM bytes); epilogue stays f32
    # (v5e has no bf16 VPU/EUP).  NOTE: bf16 input quantisation error grows
    # with K at real scale -- re-verify tolerances there.
    xpy = _patchify(y, jnp.bfloat16)
    xpx = _patchify(x, jnp.bfloat16)

    # Fold the FixedBatchNorm scale into the conv-weight columns (one-time
    # O(K*F) transform, done in f32 before the bf16 cast).
    bn_scale = params['bn_scale'].reshape(1, FEAT_C).astype(jnp.float32)
    bn_shift = params['bn_shift'].reshape(1, FEAT_C).astype(jnp.float32)
    w1 = (params['w1'].astype(jnp.float32) * bn_scale).astype(jnp.bfloat16)
    # TODO(synk): at real FEAT_C=2048 scale, zero-pad K to a multiple of the
    # MXU contraction width (128 on v5e, 256 on v6e/v7x).

    # Classifier weight stored lane-major (NUM_CLASSES, cls_in); only the
    # halves that are actually used are passed to the kernel.
    w_cls = params['w_cls'].astype(jnp.float32)
    if combination == 'cat':
        cls_args = (w_cls[:, :FEAT_C], w_cls[:, FEAT_C:2 * FEAT_C])
    else:
        cls_args = (w_cls[:, :FEAT_C],)

    tm, num_tiles = _choose_tiling(m)
    m_pad = tm * num_tiles
    xpy = _pad_rows(xpy, m_pad)
    xpx = _pad_rows(xpx, m_pad)

    cost = pl.CostEstimate(
        flops=4 * m_pad * k * FEAT_C + 6 * m_pad * FEAT_C,   # two matmuls + head
        transcendentals=0,
        bytes_accessed=(2 * m_pad * k * 2 + k * FEAT_C * 2   # bf16 acts + weight
                        + (1 + len(cls_args)) * FEAT_C * 4   # shift + cls weight
                        + m_pad * 4),                        # lane-dense feats out
    )

    # Explicit VMEM budget (double-buffered inputs + resident weight + f32
    # temporaries), clamped so it also fits v7x's 64 MiB physical VMEM.
    vmem_bytes = (2 * 2 * tm * k * 2        # two bf16 activation streams, 2 bufs
                  + 2 * k * FEAT_C * 2      # resident folded weight
                  + 4 * tm * FEAT_C * 4     # fy/fx/acc f32 temporaries + headroom
                  + 2 * tm * 4 + 8 * FEAT_C * 4)
    vmem_limit = int(min(64 * 1024 * 1024, max(2 * vmem_bytes, 16 * 1024 * 1024)))

    in_specs = [
        pl.BlockSpec((tm, k), lambda i: (i, 0)),          # patches of y
        pl.BlockSpec((tm, k), lambda i: (i, 0)),          # patches of x
        pl.BlockSpec((k, FEAT_C), lambda i: (0, 0)),      # folded w1 (resident)
        pl.BlockSpec((1, FEAT_C), lambda i: (0, 0)),      # bn shift
    ] + [pl.BlockSpec((1, FEAT_C), lambda i: (0, 0)) for _ in cls_args]

    feats = pl.pallas_call(
        functools.partial(_fused_siamese_kernel, combination=combination),
        out_shape=jax.ShapeDtypeStruct((num_tiles, 1, tm), jnp.float32),
        grid=(num_tiles,),
        in_specs=in_specs,
        out_specs=pl.BlockSpec((1, 1, tm), lambda i: (i, 0, 0)),
        compiler_params=pltpu.CompilerParams(
            dimension_semantics=("parallel",),
            vmem_limit_bytes=vmem_limit),
        cost_estimate=cost,
    )(xpy, xpx, w1, bn_shift, *cls_args)

    feats = feats.reshape(-1)[:m].reshape(n, s)        # drop pad rows, (N, S)
    features = feats.reshape(n, hp, wp)[:, None]       # (N, 1, Hp, Wp)
    # GAP commuted through the linear head: exact only because the classifier
    # is bias-free and num_classes == 1.
    logits = jnp.mean(feats, axis=1, keepdims=True)    # (N, 1)
    return logits, features


# ----------------------------------------------------------------------------
# Plain-JAX f32 reference (unfolded BN) for a sanity check.
# ----------------------------------------------------------------------------
def reference_forward(x, y, params, combination='cat'):
    n, c, h, w = x.shape
    hp, wp = h // P, w // P

    def fwd1(inp):
        xp = _patchify(inp, jnp.float32)
        f = jnp.dot(xp, params['w1'], precision=jax.lax.Precision.HIGHEST)
        f = f * params['bn_scale'] + params['bn_shift']
        return jnp.maximum(f, 0.0).reshape(n, hp * wp, FEAT_C)

    fy, fx = fwd1(y), fwd1(x)
    if combination == 'cat':
        z = jnp.concatenate([fy, fx], axis=-1)
    elif combination == 'minus':
        z = fy - fx
    else:
        z = jnp.abs(fy - fx)
    feats = jnp.einsum('nsc,kc->nsk', z, params['w_cls'],
                       precision=jax.lax.Precision.HIGHEST)
    logits = jnp.mean(feats, axis=1)
    features = feats.reshape(n, hp, wp, NUM_CLASSES).transpose(0, 3, 1, 2)
    return logits, features


if __name__ == "__main__":
    key = jax.random.PRNGKey(0)
    kx, ky, kw1, kg, kb, km, kv, kc = jax.random.split(key, 8)

    C_IN = 3
    k_dim = P * P * C_IN

    # Deterministic synthetic parameters (shapes follow the module's __init__).
    w1 = jax.random.normal(kw1, (k_dim, FEAT_C), jnp.float32) * 0.05
    gamma = 1.0 + 0.1 * jax.random.normal(kg, (FEAT_C,), jnp.float32)
    beta = 0.1 * jax.random.normal(kb, (FEAT_C,), jnp.float32)
    running_mean = 0.1 * jax.random.normal(km, (FEAT_C,), jnp.float32)
    running_var = jax.random.uniform(kv, (FEAT_C,), jnp.float32, 0.5, 1.5)
    inv = gamma / jnp.sqrt(running_var + EPS)
    bn_scale = inv.reshape(1, FEAT_C)                  # folded FixedBatchNorm
    bn_shift = (beta - running_mean * inv).reshape(1, FEAT_C)

    fwd = jax.jit(classifier_siamese_forward, static_argnames=('combination',))

    # 64x64 exercises the pad-to-(2 x 128)-tiles path; 128x128 hits the
    # even-divide multi-tile path (M = 512 -> 2 lane-dense tiles of 256).
    for (N, H, W) in ((2, 64, 64), (2, 128, 128)):
        x = jax.random.normal(kx, (N, C_IN, H, W), jnp.float32)
        y = jax.random.normal(ky, (N, C_IN, H, W), jnp.float32)
        for combination in ('cat', 'minus', 'abs'):
            cls_in = 2 * FEAT_C if combination == 'cat' else FEAT_C
            # nn.Conv2d(cls_in, 1, 1, bias=False).weight -> (1, cls_in, 1, 1);
            # stored lane-major as (NUM_CLASSES, cls_in).
            w_cls = jax.random.normal(kc, (NUM_CLASSES, cls_in), jnp.float32) * 0.02
            params = dict(w1=w1, bn_scale=bn_scale, bn_shift=bn_shift, w_cls=w_cls)

            logits, features = fwd(x, y, params, combination=combination)
            jax.block_until_ready((logits, features))

            ref_logits, ref_features = reference_forward(x, y, params, combination)
            np.testing.assert_allclose(np.asarray(logits), np.asarray(ref_logits),
                                       rtol=2e-2, atol=2e-2)
            np.testing.assert_allclose(np.asarray(features), np.asarray(ref_features),
                                       rtol=2e-2, atol=2e-2)
            assert logits.shape == (N, NUM_CLASSES)
            assert features.shape == (N, NUM_CLASSES, H // P, W // P)

    print("KERNEL_OK")
</pallas_src>

<mosaic_0001>
module attributes {stable_mosaic.version = 11 : i64} {
  func.func @_fused_siamese_kernel(%arg0: i32, %arg1: memref<128x192xbf16, #tpu.memory_space<vmem>>, %arg2: memref<128x192xbf16, #tpu.memory_space<vmem>>, %arg3: memref<192x128xbf16, #tpu.memory_space<vmem>>, %arg4: memref<1x128xf32, #tpu.memory_space<vmem>>, %arg5: memref<1x128xf32, #tpu.memory_space<vmem>>, %arg6: memref<1x128xf32, #tpu.memory_space<vmem>>, %arg7: memref<1x1x128xf32, #tpu.memory_space<vmem>>) attributes {dimension_semantics = [#tpu.dimension_semantics<parallel>], iteration_bounds = array<i64: 2>, scalar_prefetch = 0 : i64, scratch_operands = 0 : i64, tpu.core_type = #tpu.core_type<tc>, window_params = [{transform_indices = @transform_0, window_bounds = array<i64: 128, 192>}, {transform_indices = @transform_1, window_bounds = array<i64: 128, 192>}, {pipeline_mode = #tpu.pipeline_mode<synchronous>, transform_indices = @transform_2, window_bounds = array<i64: 192, 128>}, {pipeline_mode = #tpu.pipeline_mode<synchronous>, transform_indices = @transform_3, window_bounds = array<i64: 1, 128>}, {pipeline_mode = #tpu.pipeline_mode<synchronous>, transform_indices = @transform_4, window_bounds = array<i64: 1, 128>}, {pipeline_mode = #tpu.pipeline_mode<synchronous>, transform_indices = @transform_5, window_bounds = array<i64: 1, 128>}, {transform_indices = @transform_6, window_bounds = array<i64: 1, 1, 128>}]} {
    %c0 = arith.constant 0 : index
    %c0_0 = arith.constant 0 : index
    %0 = vector.load %arg3[%c0, %c0_0] : memref<192x128xbf16, #tpu.memory_space<vmem>>, vector<192x128xbf16>
    %c0_1 = arith.constant 0 : index
    %c0_2 = arith.constant 0 : index
    %1 = vector.load %arg4[%c0_1, %c0_2] : memref<1x128xf32, #tpu.memory_space<vmem>>, vector<1x128xf32>
    %c0_3 = arith.constant 0 : index
    %c0_4 = arith.constant 0 : index
    %2 = vector.load %arg1[%c0_3, %c0_4] : memref<128x192xbf16, #tpu.memory_space<vmem>>, vector<128x192xbf16>
    %cst = arith.constant dense<0.000000e+00> : vector<128x128xf32>
    %3 = tpu.matmul %2, %0, %cst {dimension_numbers = #tpu.dot_dimension_numbers<[1], [0], [0], [1], [0, 0, 1, 1], [], []>} : vector<128x192xbf16>, vector<192x128xbf16>, vector<128x128xf32> -> vector<128x128xf32>
    %4 = vector.broadcast %1 : vector<1x128xf32> to vector<128x128xf32>
    %5 = arith.addf %3, %4 : vector<128x128xf32>
    %cst_5 = arith.constant 0.000000e+00 : f32
    %6 = vector.broadcast %cst_5 : f32 to vector<128x128xf32>
    %7 = arith.maximumf %5, %6 : vector<128x128xf32>
    %c0_6 = arith.constant 0 : index
    %c0_7 = arith.constant 0 : index
    %8 = vector.load %arg2[%c0_6, %c0_7] : memref<128x192xbf16, #tpu.memory_space<vmem>>, vector<128x192xbf16>
    %cst_8 = arith.constant dense<0.000000e+00> : vector<128x128xf32>
    %9 = tpu.matmul %8, %0, %cst_8 {dimension_numbers = #tpu.dot_dimension_numbers<[1], [0], [0], [1], [0, 0, 1, 1], [], []>} : vector<128x192xbf16>, vector<192x128xbf16>, vector<128x128xf32> -> vector<128x128xf32>
    %10 = vector.broadcast %1 : vector<1x128xf32> to vector<128x128xf32>
    %11 = arith.addf %9, %10 : vector<128x128xf32>
    %cst_9 = arith.constant 0.000000e+00 : f32
    %12 = vector.broadcast %cst_9 : f32 to vector<128x128xf32>
    %13 = arith.maximumf %11, %12 : vector<128x128xf32>
    %c0_10 = arith.constant 0 : index
    %c0_11 = arith.constant 0 : index
    %14 = vector.load %arg5[%c0_10, %c0_11] : memref<1x128xf32, #tpu.memory_space<vmem>>, vector<1x128xf32>
    %15 = vector.broadcast %14 : vector<1x128xf32> to vector<128x128xf32>
    %16 = arith.mulf %7, %15 : vector<128x128xf32>
    %c0_12 = arith.constant 0 : index
    %c0_13 = arith.constant 0 : index
    %17 = vector.load %arg6[%c0_12, %c0_13] : memref<1x128xf32, #tpu.memory_space<vmem>>, vector<1x128xf32>
    %18 = vector.broadcast %17 : vector<1x128xf32> to vector<128x128xf32>
    %19 = arith.mulf %13, %18 : vector<128x128xf32>
    %20 = arith.addf %16, %19 : vector<128x128xf32>
    %cst_14 = arith.constant dense<0.000000e+00> : vector<128xf32>
    %21 = vector.multi_reduction <add>, %20, %cst_14 [1] : vector<128x128xf32> to vector<128xf32>
    %22 = vector.shape_cast %21 : vector<128xf32> to vector<1x1x128xf32>
    %c0_15 = arith.constant 0 : index
    %c0_16 = arith.constant 0 : index
    %c0_17 = arith.constant 0 : index
    %23 = vector.load %arg7[%c0_15, %c0_16, %c0_17] : memref<1x1x128xf32, #tpu.memory_space<vmem>>, vector<1x1x128xf32>
    tpu.vector_store %arg7[%c0_15, %c0_16, %c0_17], %22 {strides = array<i32>} : memref<1x1x128xf32, #tpu.memory_space<vmem>>, vector<1x1x128xf32>,
    return
  }
  func.func @transform_0(%arg0: i32) -> (i32, i32) {
    %c0_i32 = arith.constant 0 : i32
    %c0_i32_0 = arith.constant 0 : i32
    return %arg0, %c0_i32 : i32, i32
  }
  func.func @transform_1(%arg0: i32) -> (i32, i32) {
    %c0_i32 = arith.constant 0 : i32
    %c0_i32_0 = arith.constant 0 : i32
    return %arg0, %c0_i32 : i32, i32
  }
  func.func @transform_2(%arg0: i32) -> (i32, i32) {
    %c0_i32 = arith.constant 0 : i32
    %c0_i32_0 = arith.constant 0 : i32
    %c0_i32_1 = arith.constant 0 : i32
    return %c0_i32, %c0_i32_0 : i32, i32
  }
  func.func @transform_3(%arg0: i32) -> (i32, i32) {
    %c0_i32 = arith.constant 0 : i32
    %c0_i32_0 = arith.constant 0 : i32
    %c0_i32_1 = arith.constant 0 : i32
    return %c0_i32, %c0_i32_0 : i32, i32
  }
  func.func @transform_4(%arg0: i32) -> (i32, i32) {
    %c0_i32 = arith.constant 0 : i32
    %c0_i32_0 = arith.constant 0 : i32
    %c0_i32_1 = arith.constant 0 : i32
    return %c0_i32, %c0_i32_0 : i32, i32
  }
  func.func @transform_5(%arg0: i32) -> (i32, i32) {
    %c0_i32 = arith.constant 0 : i32
    %c0_i32_0 = arith.constant 0 : i32
    %c0_i32_1 = arith.constant 0 : i32
    return %c0_i32, %c0_i32_0 : i32, i32
  }
  func.func @transform_6(%arg0: i32) -> (i32, i32, i32) {
    %c0_i32 = arith.constant 0 : i32
    %c0_i32_0 = arith.constant 0 : i32
    %c0_i32_1 = arith.constant 0 : i32
    return %arg0, %c0_i32, %c0_i32_0 : i32, i32, i32
  }
}

</mosaic_0001>

<llo_original>
// kernel: classifier_siamese_forward.1
$region0: #{classifier_siamese_forward.1}
  #allocation0 [shape = 'u32[]', space=smem, size = 0x4, offset = 0x4, fixed_abs, tag = 'smem constant byte address 0x4 - core index']
  #allocation1 [shape = 'u32[144,128]{1,0:T(1,128)}', space=vmem, size = 0x12000, scoped, tag = 'internal scratch']
  %s0 = inlined_call_operand.vmem [shape: bf16[256,192], index: 0, kind: input, shape index: {}]
  %s1 = inlined_call_operand.vmem [shape: bf16[256,192], index: 1, kind: input, shape index: {}]
  %s2 = inlined_call_operand.vmem [shape: bf16[192,128], index: 2, kind: input, shape index: {}]
  %s3 = inlined_call_operand.vmem [shape: f32[1,128], index: 3, kind: input, shape index: {}]
  %s4 = inlined_call_operand.vmem [shape: f32[1,128], index: 4, kind: input, shape index: {}]
  %s5 = inlined_call_operand.vmem [shape: f32[1,128], index: 5, kind: input, shape index: {}]
  %s6 = inlined_call_operand.vmem [shape: f32[2,1,128], index: 6, kind: output, shape index: {}]
  %s7 = sld [smem:[#allocation0]]
  $region57: #{classifier_siamese_forward.1} parent=0
    _
  %s9 = ssub.s32 1, %s7
  %s10 = scalar_select 0, %s9, %s7
  loop: start=0, step=1, limit=4
  $region2: #{classifier_siamese_forward.1} parent=0 // loop_pre_header
    _
  $region3: #{classifier_siamese_forward.1} parent=0 // loop_header
    %s12 = sphi 0, %s16
    %p13 = scmp.ge.s32.totalorder %s12, 4
    %s22 = sphi 0, %s24
    %s25 = sphi 0, %s22
    %s26 = sphi 0, %s25
    %s42 = sphi 0, %s26
    %s48 = sphi 0, %s50
    %s51 = sphi 0, %s48
    %s52 = sphi 0, %s51
    %s68 = sphi 0, %s52
    %s72 = sphi 0, %s72
    %s74 = sphi 0, %s72
    %s75 = sphi 0, %s74
    %s89 = sphi 0, %s75
    %s93 = sphi 0, %s93
    %s95 = sphi 0, %s93
    %s96 = sphi 0, %s95
    %s110 = sphi 0, %s96
    %s114 = sphi 0, %s114
    %s116 = sphi 0, %s114
    %s117 = sphi 0, %s116
    %s131 = sphi 0, %s117
    %s135 = sphi 0, %s135
    %s137 = sphi 0, %s135
    %s138 = sphi 0, %s137
    %s152 = sphi 0, %s138
    %s158 = sphi 0, %s160
    %s161 = sphi 0, %s158
    %s162 = sphi 0, %s161
    %s178 = sphi 0, %s162
  $region4: #{classifier_siamese_forward.1} parent=0 // loop_header_branch
    %15 = sbr.rel (%p13) target = $region8
  $region5: #{classifier_siamese_forward.1} parent=0 // loop_body
    %s17 = ssub.s32 %s12, 1
    %s18 = ssub.s32 %s12, 2
    %s19 = sadd.s32 %s12, 1
    %s20 = ssub.s32 %s12, %s19
    %p21 = scmp.eq.s32.totalorder %s20, 0
    %s23 = sadd.s32 %s22, 1
    %s24 = scalar_select %p21, %s22, %s23
    %p27 = pneg %p21
    %p28 = scmp.eq.s32.totalorder %s12, 1
    %p29 = por %p27, %p28
    %p30 = scmp.ne.s32.totalorder %s22, %s25
    %p31 = scmp.eq.s32.totalorder %s12, 0
    %p32 = por %p30, %p31
    %p33 = scmp.ne.s32.totalorder %s22, %s25
    %p34 = scmp.eq.s32.totalorder %s17, 1
    %p35 = por %p33, %p34
    %p36 = scmp.ne.s32.totalorder %s25, %s26
    %p37 = scmp.eq.s32.totalorder %s17, 0
    %p38 = por %p36, %p37
    %p39 = scmp.ne.s32.totalorder %s25, %s26
    %p40 = scmp.eq.s32.totalorder %s18, 1
    %p41 = por %p39, %p40
    %p43 = scmp.ne.s32.totalorder %s26, %s42
    %p44 = scmp.eq.s32.totalorder %s18, 0
    %p45 = por %p43, %p44
    %s46 = ssub.s32 %s12, %s19
    %p47 = scmp.eq.s32.totalorder %s46, 0
    %s49 = sadd.s32 %s48, 1
    %s50 = scalar_select %p47, %s48, %s49
    %p53 = pneg %p47
    %p54 = scmp.eq.s32.totalorder %s12, 1
    %p55 = por %p53, %p54
    %p56 = scmp.ne.s32.totalorder %s48, %s51
    %p57 = scmp.eq.s32.totalorder %s12, 0
    %p58 = por %p56, %p57
    %p59 = scmp.ne.s32.totalorder %s48, %s51
    %p60 = scmp.eq.s32.totalorder %s17, 1
    %p61 = por %p59, %p60
    %p62 = scmp.ne.s32.totalorder %s51, %s52
    %p63 = scmp.eq.s32.totalorder %s17, 0
    %p64 = por %p62, %p63
    %p65 = scmp.ne.s32.totalorder %s51, %s52
    %p66 = scmp.eq.s32.totalorder %s18, 1
    %p67 = por %p65, %p66
    %p69 = scmp.ne.s32.totalorder %s52, %s68
    %p70 = scmp.eq.s32.totalorder %s18, 0
    %p71 = por %p69, %p70
    %s73 = sadd.s32 %s72, 1
    %p76 = scmp.eq.s32.totalorder %s12, 1
    %p77 = scmp.ne.s32.totalorder %s72, %s74
    %p78 = scmp.eq.s32.totalorder %s12, 0
    %p79 = por %p77, %p78
    %p80 = scmp.ne.s32.totalorder %s72, %s74
    %p81 = scmp.eq.s32.totalorder %s17, 1
    %p82 = por %p80, %p81
    %p83 = scmp.ne.s32.totalorder %s74, %s75
    %p84 = scmp.eq.s32.totalorder %s17, 0
    %p85 = por %p83, %p84
    %p86 = scmp.ne.s32.totalorder %s74, %s75
    %p87 = scmp.eq.s32.totalorder %s18, 1
    %p88 = por %p86, %p87
    %p90 = scmp.ne.s32.totalorder %s75, %s89
    %p91 = scmp.eq.s32.totalorder %s18, 0
    %p92 = por %p90, %p91
    %s94 = sadd.s32 %s93, 1
    %p97 = scmp.eq.s32.totalorder %s12, 1
    %p98 = scmp.ne.s32.totalorder %s93, %s95
    %p99 = scmp.eq.s32.totalorder %s12, 0
    %p100 = por %p98, %p99
    %p101 = scmp.ne.s32.totalorder %s93, %s95
    %p102 = scmp.eq.s32.totalorder %s17, 1
    %p103 = por %p101, %p102
    %p104 = scmp.ne.s32.totalorder %s95, %s96
    %p105 = scmp.eq.s32.totalorder %s17, 0
    %p106 = por %p104, %p105
    %p107 = scmp.ne.s32.totalorder %s95, %s96
    %p108 = scmp.eq.s32.totalorder %s18, 1
    %p109 = por %p107, %p108
    %p111 = scmp.ne.s32.totalorder %s96, %s110
    %p112 = scmp.eq.s32.totalorder %s18, 0
    %p113 = por %p111, %p112
    %s115 = sadd.s32 %s114, 1
    %p118 = scmp.eq.s32.totalorder %s12, 1
    %p119 = scmp.ne.s32.totalorder %s114, %s116
    %p120 = scmp.eq.s32.totalorder %s12, 0
    %p121 = por %p119, %p120
    %p122 = scmp.ne.s32.totalorder %s114, %s116
    %p123 = scmp.eq.s32.totalorder %s17, 1
    %p124 = por %p122, %p123
    %p125 = scmp.ne.s32.totalorder %s116, %s117
    %p126 = scmp.eq.s32.totalorder %s17, 0
    %p127 = por %p125, %p126
    %p128 = scmp.ne.s32.totalorder %s116, %s117
    %p129 = scmp.eq.s32.totalorder %s18, 1
    %p130 = por %p128, %p129
    %p132 = scmp.ne.s32.totalorder %s117, %s131
    %p133 = scmp.eq.s32.totalorder %s18, 0
    %p134 = por %p132, %p133
    %s136 = sadd.s32 %s135, 1
    %p139 = scmp.eq.s32.totalorder %s12, 1
    %p140 = scmp.ne.s32.totalorder %s135, %s137
    %p141 = scmp.eq.s32.totalorder %s12, 0
    %p142 = por %p140, %p141
    %p143 = scmp.ne.s32.totalorder %s135, %s137
    %p144 = scmp.eq.s32.totalorder %s17, 1
    %p145 = por %p143, %p144
    %p146 = scmp.ne.s32.totalorder %s137, %s138
    %p147 = scmp.eq.s32.totalorder %s17, 0
    %p148 = por %p146, %p147
    %p149 = scmp.ne.s32.totalorder %s137, %s138
    %p150 = scmp.eq.s32.totalorder %s18, 1
    %p151 = por %p149, %p150
    %p153 = scmp.ne.s32.totalorder %s138, %s152
    %p154 = scmp.eq.s32.totalorder %s18, 0
    %p155 = por %p153, %p154
    %s156 = ssub.s32 %s12, %s19
    %p157 = scmp.eq.s32.totalorder %s156, 0
    %s159 = sadd.s32 %s158, 1
    %s160 = scalar_select %p157, %s158, %s159
    %p163 = pneg %p157
    %p164 = scmp.eq.s32.totalorder %s12, 1
    %p165 = por %p163, %p164
    %p166 = scmp.ne.s32.totalorder %s158, %s161
    %p167 = scmp.eq.s32.totalorder %s12, 0
    %p168 = por %p166, %p167
    %p169 = scmp.ne.s32.totalorder %s158, %s161
    %p170 = scmp.eq.s32.totalorder %s17, 1
    %p171 = por %p169, %p170
    %p172 = scmp.ne.s32.totalorder %s161, %s162
    %p173 = scmp.eq.s32.totalorder %s17, 0
    %p174 = por %p172, %p173
    %p175 = scmp.ne.s32.totalorder %s161, %s162
    %p176 = scmp.eq.s32.totalorder %s18, 1
    %p177 = por %p175, %p176
    %p179 = scmp.ne.s32.totalorder %s162, %s178
    %p180 = scmp.eq.s32.totalorder %s18, 0
    %p181 = por %p179, %p180
    %p182 = scmp.le.s32.totalorder 1, %s12
    %p183 = scmp.lt.s32.totalorder %s12, 3
    %p184 = pnand %p182, %p183
    %p185 = pneg %p184
    // Predicated region
    $region9: #{classifier_siamese_forward.1} parent=5 // pred_check
      _
    $region10: #{classifier_siamese_forward.1} parent=5 // pred_check_branch
      %187 = sbr.rel (%p184) target = $region12
    $region11: #{classifier_siamese_forward.1} parent=5 // pred_region
      %s188 = ssub.s32 %s12, 1
      // Predicated region
      $region13: #{classifier_siamese_forward.1} parent=11 // pred_check
        %p189 = pneg %p85
      $region14: #{classifier_siamese_forward.1} parent=11 // pred_check_branch
        %191 = sbr.rel (%p189) target = $region16
      $region15: #{classifier_siamese_forward.1} parent=11 // pred_region
        _
      $region16: #{classifier_siamese_forward.1} parent=11 // pred_fallthru
        _
      // Predicated region
      $region17: #{classifier_siamese_forward.1} parent=11 // pred_check
        %p192 = pneg %p106
      $region18: #{classifier_siamese_forward.1} parent=11 // pred_check_branch
        %194 = sbr.rel (%p192) target = $region20
      $region19: #{classifier_siamese_forward.1} parent=11 // pred_region
        _
      $region20: #{classifier_siamese_forward.1} parent=11 // pred_fallthru
        _
      // Predicated region
      $region21: #{classifier_siamese_forward.1} parent=11 // pred_check
        %p195 = pneg %p127
      $region22: #{classifier_siamese_forward.1} parent=11 // pred_check_branch
        %197 = sbr.rel (%p195) target = $region24
      $region23: #{classifier_siamese_forward.1} parent=11 // pred_region
        _
      $region24: #{classifier_siamese_forward.1} parent=11 // pred_fallthru
        _
      // Predicated region
      $region25: #{classifier_siamese_forward.1} parent=11 // pred_check
        %p198 = pneg %p148
      $region26: #{classifier_siamese_forward.1} parent=11 // pred_check_branch
        %200 = sbr.rel (%p198) target = $region28
      $region27: #{classifier_siamese_forward.1} parent=11 // pred_region
        _
      $region28: #{classifier_siamese_forward.1} parent=11 // pred_fallthru
        _
    $region12: #{classifier_siamese_forward.1} parent=5 // pred_fallthru
      _
    %p201 = scmp.lt.s32.totalorder %s12, 2
    // Predicated region
    $region29: #{classifier_siamese_forward.1} parent=5 // pred_check
      %p202 = pneg %p201
    $region30: #{classifier_siamese_forward.1} parent=5 // pred_check_branch
      %204 = sbr.rel (%p202) target = $region32
    $region31: #{classifier_siamese_forward.1} parent=5 // pred_region
      // Predicated region
      $region33: #{classifier_siamese_forward.1} parent=31 // pred_check
        %p205 = pneg %p32
      $region34: #{classifier_siamese_forward.1} parent=31 // pred_check_branch
        %207 = sbr.rel (%p205) target = $region36
      $region35: #{classifier_siamese_forward.1} parent=31 // pred_region
        %s208 = smul.u32 16, %s12
        %p209 = scmp.lt.s32.totalorder %s208, 31
        %s210 = scalar_select %p209, %s208, 31
        %s211 = smul.addr %s210, 2
        %s212 = smul.addr %s211, 4
        %s213 = scalar_lea.vmem %s0, %s212
        %s214 = smul.u32 16, %s12
      $region36: #{classifier_siamese_forward.1} parent=31 // pred_fallthru
        _
      // Predicated region
      $region37: #{classifier_siamese_forward.1} parent=31 // pred_check
        %p215 = pneg %p58
      $region38: #{classifier_siamese_forward.1} parent=31 // pred_check_branch
        %217 = sbr.rel (%p215) target = $region40
      $region39: #{classifier_siamese_forward.1} parent=31 // pred_region
        %s218 = smul.u32 16, %s12
        %p219 = scmp.lt.s32.totalorder %s218, 31
        %s220 = scalar_select %p219, %s218, 31
        %s221 = smul.addr %s220, 2
        %s222 = smul.addr %s221, 4
        %s223 = scalar_lea.vmem %s1, %s222
        %s224 = smul.u32 16, %s12
      $region40: #{classifier_siamese_forward.1} parent=31 // pred_fallthru
        _
    $region32: #{classifier_siamese_forward.1} parent=5 // pred_fallthru
      _
    %p225 = scmp.le.s32.totalorder 1, %s12
    %p226 = scmp.lt.s32.totalorder %s12, 3
    %p227 = pnand %p225, %p226
    %p228 = pneg %p227
    // Predicated region
    $region41: #{classifier_siamese_forward.1} parent=5 // pred_check
      _
    $region42: #{classifier_siamese_forward.1} parent=5 // pred_check_branch
      %230 = sbr.rel (%p227) target = $region44
    $region43: #{classifier_siamese_forward.1} parent=5 // pred_region
      %s231 = ssub.s32 %s12, 1
      %s232 = smul.u32 16, %s17
      %p233 = scmp.lt.s32.totalorder %s232, 31
      %s234 = scalar_select %p233, %s232, 31
      %s235 = smul.addr %s234, 2
      %s236 = smul.addr %s235, 4
      %s237 = scalar_lea.vmem %s0, %s236
      %p238 = pneg %p38
      %p239 = pneg %p35
      %s240 = smul.u32 16, %s17
      %p241 = scmp.lt.s32.totalorder %s240, 31
      %s242 = scalar_select %p241, %s240, 31
      %s243 = smul.addr %s242, 2
      %s244 = smul.addr %s243, 4
      %s245 = scalar_lea.vmem %s1, %s244
      %p246 = pneg %p64
      %p247 = pneg %p61
      %p248 = pneg %p85
      %p249 = pneg %p82
      %p250 = pneg %p106
      %p251 = pneg %p103
      %p252 = pneg %p127
      %p253 = pneg %p124
      %p254 = pneg %p148
      %p255 = pneg %p145
      %p256 = pneg %p174
      %p257 = pneg %p171
      %p258 = scmp.lt.s32.totalorder %s17, 1
      %s259 = scalar_select %p258, %s17, 1
      %s260 = scalar_lea.vmem %s6, %s259
      %s261 = smul.u32 16, %s17
      %p262 = scmp.lt.s32.totalorder %s261, 31
      %s263 = scalar_select %p262, %s261, 31
      %s264 = smul.addr %s263, 2
      %s265 = smul.addr %s264, 4
      %s266 = scalar_lea.vmem %s0, %s265
      %s267 = smul.u32 16, %s17
      %s268 = smul.u32 16, %s17
      %p269 = scmp.lt.s32.totalorder %s268, 31
      %s270 = scalar_select %p269, %s268, 31
      %s271 = smul.addr %s270, 2
      %s272 = smul.addr %s271, 4
      %s273 = scalar_lea.vmem %s1, %s272
      %s274 = smul.u32 16, %s17
      %p275 = scmp.lt.s32.totalorder %s17, 1
      %s276 = scalar_select %p275, %s17, 1
      %s277 = scalar_lea.vmem %s6, %s276
      %v279 = vld [vmem:[%s2] sm:$0xf]
      %v280 = vld [vmem:[%s2 + $0x4] sm:$0xf]
      %v281 = vld [vmem:[%s2 + $0x8] sm:$0xf]
      %v282 = vld [vmem:[%s2 + $0xc] sm:$0xf]
      %v283 = vld [vmem:[%s2 + $0x10] sm:$0xf]
      %v284 = vld [vmem:[%s2 + $0x14] sm:$0xf]
      %v285 = vld [vmem:[%s2 + $0x18] sm:$0xf]
      %v286 = vld [vmem:[%s2 + $0x1c] sm:$0xf]
      %v287 = vld [vmem:[%s2 + $0x20] sm:$0xf]
      %v288 = vld [vmem:[%s2 + $0x24] sm:$0xf]
      %v289 = vld [vmem:[%s2 + $0x28] sm:$0xf]
      %v290 = vld [vmem:[%s2 + $0x2c] sm:$0xf]
      %v291 = vld [vmem:[%s2 + $0x30] sm:$0xf]
      %v292 = vld [vmem:[%s2 + $0x34] sm:$0xf]
      %v293 = vld [vmem:[%s2 + $0x38] sm:$0xf]
      %v294 = vld [vmem:[%s2 + $0x3c] sm:$0xf]
      %v295 = vld [vmem:[%s2 + $0x40] sm:$0xf]
      %v296 = vld [vmem:[%s2 + $0x44] sm:$0xf]
      %v297 = vld [vmem:[%s2 + $0x48] sm:$0xf]
      %v298 = vld [vmem:[%s2 + $0x4c] sm:$0xf]
      %v299 = vld [vmem:[%s2 + $0x50] sm:$0xf]
      %v300 = vld [vmem:[%s2 + $0x54] sm:$0xf]
      %v301 = vld [vmem:[%s2 + $0x58] sm:$0xf]
      %v302 = vld [vmem:[%s2 + $0x5c] sm:$0xf]
      %v303 = vld [vmem:[%s3] sm:$0x1]
      %v304 = vld [vmem:[%s266] sm:$0xff]
      %v305 = vld [vmem:[%s266 + $0x8] sm:$0xff]
      %v306 = vld [vmem:[%s266 + $0x10] sm:$0xff]
      %v307 = vld [vmem:[%s266 + $0x18] sm:$0xff]
      %v308 = vld [vmem:[%s266 + $0x20] sm:$0xff]
      %v309 = vld [vmem:[%s266 + $0x28] sm:$0xff]
      %v310 = vld [vmem:[%s266 + $0x30] sm:$0xff]
      %v311 = vld [vmem:[%s266 + $0x38] sm:$0xff]
      %v312 = vld [vmem:[%s266 + $0x40] sm:$0xff]
      %v313 = vld [vmem:[%s266 + $0x48] sm:$0xff]
      %v314 = vld [vmem:[%s266 + $0x50] sm:$0xff]
      %v315 = vld [vmem:[%s266 + $0x58] sm:$0xff]
      %v316 = vld [vmem:[%s266 + $0x60] sm:$0xff]
      %v317 = vld [vmem:[%s266 + $0x68] sm:$0xff]
      %v318 = vld [vmem:[%s266 + $0x70] sm:$0xff]
      %v319 = vld [vmem:[%s266 + $0x78] sm:$0xff]
      %v321 = vlaneseq
      %v322 = vshrl.u32 %v321, 7
      %v323 = vsub.s32 0, %v322
      %v324 = vrot.slane %v303, %v323
      %v342 = vunpack.c.l.b16 %v304
      %v343 = vunpack.c.h.b16 %v304
      %v344 = vunpack.c.l.b16 %v305
      %v345 = vunpack.c.h.b16 %v305
      %v346 = vunpack.c.l.b16 %v306
      %v347 = vunpack.c.h.b16 %v306
      %v348 = vunpack.c.l.b16 %v307
      %v349 = vunpack.c.h.b16 %v307
      %v350 = vunpack.c.l.b16 %v308
      %v351 = vunpack.c.h.b16 %v308
      %v352 = vunpack.c.l.b16 %v309
      %v353 = vunpack.c.h.b16 %v309
      %v354 = vunpack.c.l.b16 %v310
      %v355 = vunpack.c.h.b16 %v310
      %v356 = vunpack.c.l.b16 %v311
      %v357 = vunpack.c.h.b16 %v311
      %v358 = vunpack.c.l.b16 %v312
      %v359 = vunpack.c.h.b16 %v312
      %v360 = vunpack.c.l.b16 %v313
      %v361 = vunpack.c.h.b16 %v313
      %v362 = vunpack.c.l.b16 %v314
      %v363 = vunpack.c.h.b16 %v314
      %v364 = vunpack.c.l.b16 %v315
      %v365 = vunpack.c.h.b16 %v315
      %v366 = vunpack.c.l.b16 %v316
      %v367 = vunpack.c.h.b16 %v316
      %v368 = vunpack.c.l.b16 %v317
      %v369 = vunpack.c.h.b16 %v317
      %v370 = vunpack.c.l.b16 %v318
      %v371 = vunpack.c.h.b16 %v318
      %v372 = vunpack.c.l.b16 %v319
      %v373 = vunpack.c.h.b16 %v319
      %v374 = vpack.c.b16 %v344, %v342
      %v375 = vpack.c.b16 %v345, %v343
      %v376 = vpack.c.b16 %v348, %v346
      %v377 = vpack.c.b16 %v349, %v347
      %v378 = vpack.c.b16 %v352, %v350
      %v379 = vpack.c.b16 %v353, %v351
      %v380 = vpack.c.b16 %v356, %v354
      %v381 = vpack.c.b16 %v357, %v355
      %v382 = vpack.c.b16 %v360, %v358
      %v383 = vpack.c.b16 %v361, %v359
      %v384 = vpack.c.b16 %v364, %v362
      %v385 = vpack.c.b16 %v365, %v363
      %v386 = vpack.c.b16 %v368, %v366
      %v387 = vpack.c.b16 %v369, %v367
      %v388 = vpack.c.b16 %v372, %v370
      %v389 = vpack.c.b16 %v373, %v371
      %v422 = vunpack.c.l.b16 %v279
      %v423 = vunpack.c.l.b16 %v280
      %v424 = vunpack.c.l.b16 %v281
      %v425 = vunpack.c.l.b16 %v282
      %v426 = vunpack.c.l.b16 %v283
      %v427 = vunpack.c.l.b16 %v284
      %v428 = vunpack.c.l.b16 %v285
      %v429 = vunpack.c.l.b16 %v286
      %v430 = vunpack.c.l.b16 %v287
      %v431 = vunpack.c.l.b16 %v288
      %v432 = vunpack.c.l.b16 %v289
      %v433 = vunpack.c.l.b16 %v290
      %v434 = vunpack.c.l.b16 %v291
      %v435 = vunpack.c.l.b16 %v292
      %v436 = vunpack.c.l.b16 %v293
      %v437 = vunpack.c.l.b16 %v294
      %v438 = vunpack.c.l.b16 %v295
      %v439 = vunpack.c.l.b16 %v296
      %v440 = vunpack.c.l.b16 %v297
      %v441 = vunpack.c.l.b16 %v298
      %v442 = vunpack.c.l.b16 %v299
      %v443 = vunpack.c.l.b16 %v300
      %v444 = vunpack.c.l.b16 %v301
      %v445 = vunpack.c.l.b16 %v302
      %v446 = vpack.c.b16 %v423, %v422
      %v447 = vpack.c.b16 %v425, %v424
      %v448 = vpack.c.b16 %v427, %v426
      %v449 = vpack.c.b16 %v429, %v428
      %v450 = vpack.c.b16 %v431, %v430
      %v451 = vpack.c.b16 %v433, %v432
      %v452 = vpack.c.b16 %v435, %v434
      %v453 = vpack.c.b16 %v437, %v436
      %v454 = vpack.c.b16 %v439, %v438
      %v455 = vpack.c.b16 %v441, %v440
      %v456 = vpack.c.b16 %v443, %v442
      %v457 = vpack.c.b16 %v445, %v444
      %vm470 = vcmask 523264
      %v472 = vsel %vm470, %v375, 0
      %v475 = vsel %vm470, %v377, 0
      %v478 = vsel %vm470, %v379, 0
      %v481 = vsel %vm470, %v381, 0
      %v484 = vsel %vm470, %v383, 0
      %v487 = vsel %vm470, %v385, 0
      %v490 = vsel %vm470, %v387, 0
      %v493 = vsel %vm470, %v389, 0
      %495 = vmatprep.subr.bf16.mxu0 0
      %496 = vmatpush1.bf16.msra.mxu0 %v453
      %497 = vmatprep.subr.bf16.mxu0 0
      %498 = vmatpush1.bf16.msra.mxu0 %v452
      %499 = vmatprep.subr.bf16.mxu0 0
      %500 = vmatpush1.bf16.msra.mxu0 %v451
      %501 = vmatprep.subr.bf16.mxu0 0
      %502 = vmatpush1.bf16.msra.mxu0 %v450
      %503 = vmatprep.subr.bf16.mxu0 0
      %504 = vmatpush1.bf16.msra.mxu0 %v449
      %505 = vmatprep.subr.bf16.mxu0 0
      %506 = vmatpush1.bf16.msra.mxu0 %v448
      %507 = vmatprep.subr.bf16.mxu0 0
      %508 = vmatpush1.bf16.msra.mxu0 %v447
      %509 = vmatprep.subr.bf16.mxu0 0
      %510 = vmatpush1.bf16.msra.mxu0 %v446
      %511 = vmatprep.subr.bf16.mxu0 0
      %512 = vmatpush2.bf16.msra.mxu0 0
      %513 = vmatprep.subr.bf16.mxu0 0
      %514 = vmatpush2.bf16.msra.mxu0 0
      %515 = vmatprep.subr.bf16.mxu0 0
      %516 = vmatpush2.bf16.msra.mxu0 0
      %517 = vmatprep.subr.bf16.mxu0 0
      %518 = vmatpush2.bf16.msra.mxu0 0
      %519 = vmatprep.subr.bf16.mxu0 0
      %520 = vmatpush2.bf16.msra.mxu0 %v457
      %521 = vmatprep.subr.bf16.mxu0 0
      %522 = vmatpush2.bf16.msra.mxu0 %v456
      %523 = vmatprep.subr.bf16.mxu0 0
      %524 = vmatpush2.bf16.msra.mxu0 %v455
      %525 = vmatprep.subr.bf16.mxu0 0
      %526 = vmatpush2.bf16.msra.mxu0 %v454
      %527 = vmatprep.mubr.bf16.mxu0 %v472
      %528 = vmatmul.mubr.bf16.gmra.mxu0 %v374
      %v529 = vpop.f32.mrf.mxu0
      %v530 = vadd.f32 %v324, %v529
      %v531 = vpop.f32.mrf.mxu0
      %v532 = vpop.f32.mrf.mxu0
      %v533 = vadd.f32 %v324, %v532
      %v534 = vpop.f32.mrf.mxu0
      %535 = vmatprep.mubr.bf16.mxu0 %v475
      %536 = vmatmul.mubr.bf16.gmra.mxu0 %v376
      %v537 = vpop.f32.mrf.mxu0
      %v538 = vadd.f32 %v324, %v537
      %v539 = vpop.f32.mrf.mxu0
      %v540 = vpop.f32.mrf.mxu0
      %v541 = vadd.f32 %v324, %v540
      %v542 = vpop.f32.mrf.mxu0
      %543 = vmatprep.mubr.bf16.mxu0 %v478
      %544 = vmatmul.mubr.bf16.gmra.mxu0 %v378
      %v545 = vpop.f32.mrf.mxu0
      %v546 = vadd.f32 %v324, %v545
      %v547 = vpop.f32.mrf.mxu0
      %v548 = vpop.f32.mrf.mxu0
      %v549 = vadd.f32 %v324, %v548
      %v550 = vpop.f32.mrf.mxu0
      %551 = vmatprep.mubr.bf16.mxu0 %v481
      %552 = vmatmul.mubr.bf16.gmra.mxu0 %v380
      %v553 = vpop.f32.mrf.mxu0
      %v554 = vadd.f32 %v324, %v553
      %v555 = vpop.f32.mrf.mxu0
      %v556 = vpop.f32.mrf.mxu0
      %v557 = vadd.f32 %v324, %v556
      %v558 = vpop.f32.mrf.mxu0
      %559 = vmatprep.mubr.bf16.mxu0 %v484
      %560 = vmatmul.mubr.bf16.gmra.mxu0 %v382
      %v561 = vpop.f32.mrf.mxu0
      %v562 = vadd.f32 %v324, %v561
      %v563 = vpop.f32.mrf.mxu0
      %v564 = vpop.f32.mrf.mxu0
      %v565 = vadd.f32 %v324, %v564
      %v566 = vpop.f32.mrf.mxu0
      %567 = vmatprep.mubr.bf16.mxu0 %v487
      %568 = vmatmul.mubr.bf16.gmra.mxu0 %v384
      %v569 = vpop.f32.mrf.mxu0
      %v570 = vadd.f32 %v324, %v569
      %v571 = vpop.f32.mrf.mxu0
      %v572 = vpop.f32.mrf.mxu0
      %v573 = vadd.f32 %v324, %v572
      %v574 = vpop.f32.mrf.mxu0
      %575 = vmatprep.mubr.bf16.mxu0 %v490
      %576 = vmatmul.mubr.bf16.gmra.mxu0 %v386
      %v577 = vpop.f32.mrf.mxu0
      %v578 = vadd.f32 %v324, %v577
      %v579 = vpop.f32.mrf.mxu0
      %v580 = vpop.f32.mrf.mxu0
      %v581 = vadd.f32 %v324, %v580
      %v582 = vpop.f32.mrf.mxu0
      %583 = vmatprep.mubr.bf16.mxu0 %v493
      %584 = vmatmul.mubr.bf16.gmra.mxu0 %v388
      %v585 = vpop.f32.mrf.mxu0
      %v586 = vadd.f32 %v324, %v585
      %v587 = vpop.f32.mrf.mxu0
      %v588 = vpop.f32.mrf.mxu0
      %v589 = vadd.f32 %v324, %v588
      %v590 = vpop.f32.mrf.mxu0
      %591 = vdwg.mxu0
      %v592 = vmax.f32 %v530, 0.0
      %v593 = vmax.f32 %v533, 0.0
      %v594 = vmax.f32 %v538, 0.0
      %v595 = vmax.f32 %v541, 0.0
      %v596 = vmax.f32 %v546, 0.0
      %v597 = vmax.f32 %v549, 0.0
      %v598 = vmax.f32 %v554, 0.0
      %v599 = vmax.f32 %v557, 0.0
      %v600 = vmax.f32 %v562, 0.0
      %v601 = vmax.f32 %v565, 0.0
      %v602 = vmax.f32 %v570, 0.0
      %v603 = vmax.f32 %v573, 0.0
      %v604 = vmax.f32 %v578, 0.0
      %v605 = vmax.f32 %v581, 0.0
      %v606 = vmax.f32 %v586, 0.0
      %v607 = vmax.f32 %v589, 0.0
      %v608 = vld [vmem:[%s273] sm:$0xff]
      %v609 = vld [vmem:[%s273 + $0x8] sm:$0xff]
      %v610 = vld [vmem:[%s273 + $0x10] sm:$0xff]
      %v611 = vld [vmem:[%s273 + $0x18] sm:$0xff]
      %v612 = vld [vmem:[%s273 + $0x20] sm:$0xff]
      %v613 = vld [vmem:[%s273 + $0x28] sm:$0xff]
      %v614 = vld [vmem:[%s273 + $0x30] sm:$0xff]
      %v615 = vld [vmem:[%s273 + $0x38] sm:$0xff]
      %v616 = vld [vmem:[%s273 + $0x40] sm:$0xff]
      %v617 = vld [vmem:[%s273 + $0x48] sm:$0xff]
      %v618 = vld [vmem:[%s273 + $0x50] sm:$0xff]
      %v619 = vld [vmem:[%s273 + $0x58] sm:$0xff]
      %v620 = vld [vmem:[%s273 + $0x60] sm:$0xff]
      %v621 = vld [vmem:[%s273 + $0x68] sm:$0xff]
      %v622 = vld [vmem:[%s273 + $0x70] sm:$0xff]
      %v623 = vld [vmem:[%s273 + $0x78] sm:$0xff]
      %v640 = vunpack.c.l.b16 %v608
      %v641 = vunpack.c.h.b16 %v608
      %v642 = vunpack.c.l.b16 %v609
      %v643 = vunpack.c.h.b16 %v609
      %v644 = vunpack.c.l.b16 %v610
      %v645 = vunpack.c.h.b16 %v610
      %v646 = vunpack.c.l.b16 %v611
      %v647 = vunpack.c.h.b16 %v611
      %v648 = vunpack.c.l.b16 %v612
      %v649 = vunpack.c.h.b16 %v612
      %v650 = vunpack.c.l.b16 %v613
      %v651 = vunpack.c.h.b16 %v613
      %v652 = vunpack.c.l.b16 %v614
      %v653 = vunpack.c.h.b16 %v614
      %v654 = vunpack.c.l.b16 %v615
      %v655 = vunpack.c.h.b16 %v615
      %v656 = vunpack.c.l.b16 %v616
      %v657 = vunpack.c.h.b16 %v616
      %v658 = vunpack.c.l.b16 %v617
      %v659 = vunpack.c.h.b16 %v617
      %v660 = vunpack.c.l.b16 %v618
      %v661 = vunpack.c.h.b16 %v618
      %v662 = vunpack.c.l.b16 %v619
      %v663 = vunpack.c.h.b16 %v619
      %v664 = vunpack.c.l.b16 %v620
      %v665 = vunpack.c.h.b16 %v620
      %v666 = vunpack.c.l.b16 %v621
      %v667 = vunpack.c.h.b16 %v621
      %v668 = vunpack.c.l.b16 %v622
      %v669 = vunpack.c.h.b16 %v622
      %v670 = vunpack.c.l.b16 %v623
      %v671 = vunpack.c.h.b16 %v623
      %v672 = vpack.c.b16 %v642, %v640
      %v673 = vpack.c.b16 %v643, %v641
      %v674 = vpack.c.b16 %v646, %v644
      %v675 = vpack.c.b16 %v647, %v645
      %v676 = vpack.c.b16 %v650, %v648
      %v677 = vpack.c.b16 %v651, %v649
      %v678 = vpack.c.b16 %v654, %v652
      %v679 = vpack.c.b16 %v655, %v653
      %v680 = vpack.c.b16 %v658, %v656
      %v681 = vpack.c.b16 %v659, %v657
      %v682 = vpack.c.b16 %v662, %v660
      %v683 = vpack.c.b16 %v663, %v661
      %v684 = vpack.c.b16 %v666, %v664
      %v685 = vpack.c.b16 %v667, %v665
      %v686 = vpack.c.b16 %v670, %v668
      %v687 = vpack.c.b16 %v671, %v669
      %v697 = vsel %vm470, %v673, 0
      %v700 = vsel %vm470, %v675, 0
      %v703 = vsel %vm470, %v677, 0
      %v706 = vsel %vm470, %v679, 0
      %v709 = vsel %vm470, %v681, 0
      %v712 = vsel %vm470, %v683, 0
      %v715 = vsel %vm470, %v685, 0
      %v718 = vsel %vm470, %v687, 0
      %720 = vmatprep.subr.bf16.mxu0 0
      %721 = vmatpush1.bf16.msra.mxu0 %v453
      %722 = vmatprep.subr.bf16.mxu0 0
      %723 = vmatpush1.bf16.msra.mxu0 %v452
      %724 = vmatprep.subr.bf16.mxu0 0
      %725 = vmatpush1.bf16.msra.mxu0 %v451
      %726 = vmatprep.subr.bf16.mxu0 0
      %727 = vmatpush1.bf16.msra.mxu0 %v450
      %728 = vmatprep.subr.bf16.mxu0 0
      %729 = vmatpush1.bf16.msra.mxu0 %v449
      %730 = vmatprep.subr.bf16.mxu0 0
      %731 = vmatpush1.bf16.msra.mxu0 %v448
      %732 = vmatprep.subr.bf16.mxu0 0
      %733 = vmatpush1.bf16.msra.mxu0 %v447
      %734 = vmatprep.subr.bf16.mxu0 0
      %735 = vmatpush1.bf16.msra.mxu0 %v446
      %736 = vmatprep.subr.bf16.mxu0 0
      %737 = vmatpush2.bf16.msra.mxu0 0
      %738 = vmatprep.subr.bf16.mxu0 0
      %739 = vmatpush2.bf16.msra.mxu0 0
      %740 = vmatprep.subr.bf16.mxu0 0
      %741 = vmatpush2.bf16.msra.mxu0 0
      %742 = vmatprep.subr.bf16.mxu0 0
      %743 = vmatpush2.bf16.msra.mxu0 0
      %744 = vmatprep.subr.bf16.mxu0 0
      %745 = vmatpush2.bf16.msra.mxu0 %v457
      %746 = vmatprep.subr.bf16.mxu0 0
      %747 = vmatpush2.bf16.msra.mxu0 %v456
      %748 = vmatprep.subr.bf16.mxu0 0
      %749 = vmatpush2.bf16.msra.mxu0 %v455
      %750 = vmatprep.subr.bf16.mxu0 0
      %751 = vmatpush2.bf16.msra.mxu0 %v454
      %752 = vmatprep.mubr.bf16.mxu0 %v697
      %753 = vmatmul.mubr.bf16.gmra.mxu0 %v672
      %v754 = vpop.f32.mrf.mxu0
      %v755 = vadd.f32 %v324, %v754
      %v756 = vpop.f32.mrf.mxu0
      %v757 = vpop.f32.mrf.mxu0
      %v758 = vadd.f32 %v324, %v757
      %v759 = vpop.f32.mrf.mxu0
      %760 = vmatprep.mubr.bf16.mxu0 %v700
      %761 = vmatmul.mubr.bf16.gmra.mxu0 %v674
      %v762 = vpop.f32.mrf.mxu0
      %v763 = vadd.f32 %v324, %v762
      %v764 = vpop.f32.mrf.mxu0
      %v765 = vpop.f32.mrf.mxu0
      %v766 = vadd.f32 %v324, %v765
      %v767 = vpop.f32.mrf.mxu0
      %768 = vmatprep.mubr.bf16.mxu0 %v703
      %769 = vmatmul.mubr.bf16.gmra.mxu0 %v676
      %v770 = vpop.f32.mrf.mxu0
      %v771 = vadd.f32 %v324, %v770
      %v772 = vpop.f32.mrf.mxu0
      %v773 = vpop.f32.mrf.mxu0
      %v774 = vadd.f32 %v324, %v773
      %v775 = vpop.f32.mrf.mxu0
      %776 = vmatprep.mubr.bf16.mxu0 %v706
      %777 = vmatmul.mubr.bf16.gmra.mxu0 %v678
      %v778 = vpop.f32.mrf.mxu0
      %v779 = vadd.f32 %v324, %v778
      %v780 = vpop.f32.mrf.mxu0
      %v781 = vpop.f32.mrf.mxu0
      %v782 = vadd.f32 %v324, %v781
      %v783 = vpop.f32.mrf.mxu0
      %784 = vmatprep.mubr.bf16.mxu0 %v709
      %785 = vmatmul.mubr.bf16.gmra.mxu0 %v680
      %v786 = vpop.f32.mrf.mxu0
      %v787 = vadd.f32 %v324, %v786
      %v788 = vpop.f32.mrf.mxu0
      %v789 = vpop.f32.mrf.mxu0
      %v790 = vadd.f32 %v324, %v789
      %v791 = vpop.f32.mrf.mxu0
      %792 = vmatprep.mubr.bf16.mxu0 %v712
      %793 = vmatmul.mubr.bf16.gmra.mxu0 %v682
      %v794 = vpop.f32.mrf.mxu0
      %v795 = vadd.f32 %v324, %v794
      %v796 = vpop.f32.mrf.mxu0
      %v797 = vpop.f32.mrf.mxu0
      %v798 = vadd.f32 %v324, %v797
      %v799 = vpop.f32.mrf.mxu0
      %800 = vmatprep.mubr.bf16.mxu0 %v715
      %801 = vmatmul.mubr.bf16.gmra.mxu0 %v684
      %v802 = vpop.f32.mrf.mxu0
      %v803 = vadd.f32 %v324, %v802
      %v804 = vpop.f32.mrf.mxu0
      %v805 = vpop.f32.mrf.mxu0
      %v806 = vadd.f32 %v324, %v805
      %v807 = vpop.f32.mrf.mxu0
      %808 = vmatprep.mubr.bf16.mxu0 %v718
      %809 = vmatmul.mubr.bf16.gmra.mxu0 %v686
      %v810 = vpop.f32.mrf.mxu0
      %v811 = vadd.f32 %v324, %v810
      %v812 = vpop.f32.mrf.mxu0
      %v813 = vpop.f32.mrf.mxu0
      %v814 = vadd.f32 %v324, %v813
      %v815 = vpop.f32.mrf.mxu0
      %816 = vdwg.mxu0
      %v817 = vmax.f32 %v755, 0.0
      %v818 = vmax.f32 %v758, 0.0
      %v819 = vmax.f32 %v763, 0.0
      %v820 = vmax.f32 %v766, 0.0
      %v821 = vmax.f32 %v771, 0.0
      %v822 = vmax.f32 %v774, 0.0
      %v823 = vmax.f32 %v779, 0.0
      %v824 = vmax.f32 %v782, 0.0
      %v825 = vmax.f32 %v787, 0.0
      %v826 = vmax.f32 %v790, 0.0
      %v827 = vmax.f32 %v795, 0.0
      %v828 = vmax.f32 %v798, 0.0
      %v829 = vmax.f32 %v803, 0.0
      %v830 = vmax.f32 %v806, 0.0
      %v831 = vmax.f32 %v811, 0.0
      %v832 = vmax.f32 %v814, 0.0
      %v833 = vld [vmem:[%s4] sm:$0x1]
      %v835 = vlaneseq
      %v836 = vshrl.u32 %v835, 7
      %v837 = vsub.s32 0, %v836
      %v838 = vrot.slane %v833, %v837
      %v840 = vmul.f32 %v592, %v838
      %v841 = vmul.f32 %v593, %v838
      %v842 = vmul.f32 %v594, %v838
      %v843 = vmul.f32 %v595, %v838
      %v844 = vmul.f32 %v596, %v838
      %v845 = vmul.f32 %v597, %v838
      %v846 = vmul.f32 %v598, %v838
      %v847 = vmul.f32 %v599, %v838
      %v848 = vmul.f32 %v600, %v838
      %v849 = vmul.f32 %v601, %v838
      %v850 = vmul.f32 %v602, %v838
      %v851 = vmul.f32 %v603, %v838
      %v852 = vmul.f32 %v604, %v838
      %v853 = vmul.f32 %v605, %v838
      %v854 = vmul.f32 %v606, %v838
      %v855 = vmul.f32 %v607, %v838
      %v856 = vld [vmem:[%s5] sm:$0x1]
      %v858 = vlaneseq
      %v859 = vshrl.u32 %v858, 7
      %v860 = vsub.s32 0, %v859
      %v861 = vrot.slane %v856, %v860
      %v863 = vmul.f32 %v817, %v861
      %v864 = vmul.f32 %v818, %v861
      %v865 = vmul.f32 %v819, %v861
      %v866 = vmul.f32 %v820, %v861
      %v867 = vmul.f32 %v821, %v861
      %v868 = vmul.f32 %v822, %v861
      %v869 = vmul.f32 %v823, %v861
      %v870 = vmul.f32 %v824, %v861
      %v871 = vmul.f32 %v825, %v861
      %v872 = vmul.f32 %v826, %v861
      %v873 = vmul.f32 %v827, %v861
      %v874 = vmul.f32 %v828, %v861
      %v875 = vmul.f32 %v829, %v861
      %v876 = vmul.f32 %v830, %v861
      %v877 = vmul.f32 %v831, %v861
      %v878 = vmul.f32 %v832, %v861
      %v879 = vadd.f32 %v840, %v863
      %v880 = vadd.f32 %v841, %v864
      %v881 = vadd.f32 %v842, %v865
      %v882 = vadd.f32 %v843, %v866
      %v883 = vadd.f32 %v844, %v867
      %v884 = vadd.f32 %v845, %v868
      %v885 = vadd.f32 %v846, %v869
      %v886 = vadd.f32 %v847, %v870
      %v887 = vadd.f32 %v848, %v871
      %v888 = vadd.f32 %v849, %v872
      %v889 = vadd.f32 %v850, %v873
      %v890 = vadd.f32 %v851, %v874
      %v891 = vadd.f32 %v852, %v875
      %v892 = vadd.f32 %v853, %v876
      %v893 = vadd.f32 %v854, %v877
      %v894 = vadd.f32 %v855, %v878
      %895 = vadd.xlane.f32.xlu0 %v879
      %v896 = vpop.xlane.xlu0 %895
      %897 = vadd.xlane.f32.xlu0 %v880
      %v898 = vpop.xlane.xlu0 %897
      %899 = vadd.xlane.f32.xlu0 %v881
      %v900 = vpop.xlane.xlu0 %899
      %901 = vadd.xlane.f32.xlu0 %v882
      %v902 = vpop.xlane.xlu0 %901
      %903 = vadd.xlane.f32.xlu0 %v883
      %v904 = vpop.xlane.xlu0 %903
      %905 = vadd.xlane.f32.xlu0 %v884
      %v906 = vpop.xlane.xlu0 %905
      %907 = vadd.xlane.f32.xlu0 %v885
      %v908 = vpop.xlane.xlu0 %907
      %909 = vadd.xlane.f32.xlu0 %v886
      %v910 = vpop.xlane.xlu0 %909
      %911 = vadd.xlane.f32.xlu0 %v887
      %v912 = vpop.xlane.xlu0 %911
      %913 = vadd.xlane.f32.xlu0 %v888
      %v914 = vpop.xlane.xlu0 %913
      %915 = vadd.xlane.f32.xlu0 %v889
      %v916 = vpop.xlane.xlu0 %915
      %917 = vadd.xlane.f32.xlu0 %v890
      %v918 = vpop.xlane.xlu0 %917
      %919 = vadd.xlane.f32.xlu0 %v891
      %v920 = vpop.xlane.xlu0 %919
      %921 = vadd.xlane.f32.xlu0 %v892
      %v922 = vpop.xlane.xlu0 %921
      %923 = vadd.xlane.f32.xlu0 %v893
      %v924 = vpop.xlane.xlu0 %923
      %925 = vadd.xlane.f32.xlu0 %v894
      %v926 = vpop.xlane.xlu0 %925
      %v943 = vlaneseq
      %v944 = vand.u32 %v943, 127
      %v945 = vlaneseq
      %v946 = vshrl.u32 %v945, 7
      %v947 = vsub.s32 %v944, %v946
      %v948 = vrot.slane %v896, %v947
      %v949 = vadd.s32 %v944, 4294967288
      %v950 = vlaneseq
      %v951 = vshrl.u32 %v950, 7
      %v952 = vsub.s32 %v949, %v951
      %v953 = vrot.slane %v898, %v952
      %vm954 = vcmask 130112
      %v955 = vsel %vm954, %v953, %v948
      %v956 = vadd.s32 %v944, 4294967280
      %v957 = vlaneseq
      %v958 = vshrl.u32 %v957, 7
      %v959 = vsub.s32 %v956, %v958
      %v960 = vrot.slane %v900, %v959
      %vm961 = vcmask 195712
      %v962 = vsel %vm961, %v960, %v955
      %v963 = vadd.s32 %v944, 4294967272
      %v964 = vlaneseq
      %v965 = vshrl.u32 %v964, 7
      %v966 = vsub.s32 %v963, %v965
      %v967 = vrot.slane %v902, %v966
      %vm968 = vcmask 261312
      %v969 = vsel %vm968, %v967, %v962
      %v970 = vadd.s32 %v944, 4294967264
      %v971 = vlaneseq
      %v972 = vshrl.u32 %v971, 7
      %v973 = vsub.s32 %v970, %v972
      %v974 = vrot.slane %v904, %v973
      %vm975 = vcmask 326912
      %v976 = vsel %vm975, %v974, %v969
      %v977 = vadd.s32 %v944, 4294967256
      %v978 = vlaneseq
      %v979 = vshrl.u32 %v978, 7
      %v980 = vsub.s32 %v977, %v979
      %v981 = vrot.slane %v906, %v980
      %vm982 = vcmask 392512
      %v983 = vsel %vm982, %v981, %v976
      %v984 = vadd.s32 %v944, 4294967248
      %v985 = vlaneseq
      %v986 = vshrl.u32 %v985, 7
      %v987 = vsub.s32 %v984, %v986
      %v988 = vrot.slane %v908, %v987
      %vm989 = vcmask 458112
      %v990 = vsel %vm989, %v988, %v983
      %v991 = vadd.s32 %v944, 4294967240
      %v992 = vlaneseq
      %v993 = vshrl.u32 %v992, 7
      %v994 = vsub.s32 %v991, %v993
      %v995 = vrot.slane %v910, %v994
      %vm996 = vcmask 523712
      %v997 = vsel %vm996, %v995, %v990
      %v998 = vadd.s32 %v944, 4294967232
      %v999 = vlaneseq
      %v1000 = vshrl.u32 %v999, 7
      %v1001 = vsub.s32 %v998, %v1000
      %v1002 = vrot.slane %v912, %v1001
      %vm1003 = vcmask 589312
      %v1004 = vsel %vm1003, %v1002, %v997
      %v1005 = vadd.s32 %v944, 4294967224
      %v1006 = vlaneseq
      %v1007 = vshrl.u32 %v1006, 7
      %v1008 = vsub.s32 %v1005, %v1007
      %v1009 = vrot.slane %v914, %v1008
      %vm1010 = vcmask 654912
      %v1011 = vsel %vm1010, %v1009, %v1004
      %v1012 = vadd.s32 %v944, 4294967216
      %v1013 = vlaneseq
      %v1014 = vshrl.u32 %v1013, 7
      %v1015 = vsub.s32 %v1012, %v1014
      %v1016 = vrot.slane %v916, %v1015
      %vm1017 = vcmask 720512
      %v1018 = vsel %vm1017, %v1016, %v1011
      %v1019 = vadd.s32 %v944, 4294967208
      %v1020 = vlaneseq
      %v1021 = vshrl.u32 %v1020, 7
      %v1022 = vsub.s32 %v1019, %v1021
      %v1023 = vrot.slane %v918, %v1022
      %vm1024 = vcmask 786112
      %v1025 = vsel %vm1024, %v1023, %v1018
      %v1026 = vadd.s32 %v944, 4294967200
      %v1027 = vlaneseq
      %v1028 = vshrl.u32 %v1027, 7
      %v1029 = vsub.s32 %v1026, %v1028
      %v1030 = vrot.slane %v920, %v1029
      %vm1031 = vcmask 851712
      %v1032 = vsel %vm1031, %v1030, %v1025
      %v1033 = vadd.s32 %v944, 4294967192
      %v1034 = vlaneseq
      %v1035 = vshrl.u32 %v1034, 7
      %v1036 = vsub.s32 %v1033, %v1035
      %v1037 = vrot.slane %v922, %v1036
      %vm1038 = vcmask 917312
      %v1039 = vsel %vm1038, %v1037, %v1032
      %v1040 = vadd.s32 %v944, 4294967184
      %v1041 = vlaneseq
      %v1042 = vshrl.u32 %v1041, 7
      %v1043 = vsub.s32 %v1040, %v1042
      %v1044 = vrot.slane %v924, %v1043
      %vm1045 = vcmask 982912
      %v1046 = vsel %vm1045, %v1044, %v1039
      %v1047 = vadd.s32 %v944, 4294967176
      %v1048 = vlaneseq
      %v1049 = vshrl.u32 %v1048, 7
      %v1050 = vsub.s32 %v1047, %v1049
      %v1051 = vrot.slane %v926, %v1050
      %vm1052 = vcmask 1048512
      %v1053 = vsel %vm1052, %v1051, %v1046
      %1055 = vst [vmem:[%s277] sm:$0x1] %v1053
      %p1056 = scmp.lt.s32.totalorder %s17, 1
      %s1057 = scalar_select %p1056, %s17, 1
      %s1058 = scalar_lea.vmem %s6, %s1057
      // Predicated region
      $region45: #{classifier_siamese_forward.1} parent=43 // pred_check
        %p1059 = pneg %p171
      $region46: #{classifier_siamese_forward.1} parent=43 // pred_check_branch
        %1061 = sbr.rel (%p1059) target = $region48
      $region47: #{classifier_siamese_forward.1} parent=43 // pred_region
        _
      $region48: #{classifier_siamese_forward.1} parent=43 // pred_fallthru
        _
    $region44: #{classifier_siamese_forward.1} parent=5 // pred_fallthru
      _
    %p1062 = scmp.le.s32.totalorder 2, %s12
    // Predicated region
    $region49: #{classifier_siamese_forward.1} parent=5 // pred_check
      %p1063 = pneg %p1062
    $region50: #{classifier_siamese_forward.1} parent=5 // pred_check_branch
      %1065 = sbr.rel (%p1063) target = $region52
    $region51: #{classifier_siamese_forward.1} parent=5 // pred_region
      %s1066 = ssub.s32 %s12, 2
      // Predicated region
      $region53: #{classifier_siamese_forward.1} parent=51 // pred_check
        %p1067 = pneg %p177
      $region54: #{classifier_siamese_forward.1} parent=51 // pred_check_branch
        %1069 = sbr.rel (%p1067) target = $region56
      $region55: #{classifier_siamese_forward.1} parent=51 // pred_region
        %p1070 = scmp.lt.s32.totalorder %s18, 1
        %s1071 = scalar_select %p1070, %s18, 1
        %s1072 = scalar_lea.vmem %s6, %s1071
      $region56: #{classifier_siamese_forward.1} parent=51 // pred_fallthru
        _
    $region52: #{classifier_siamese_forward.1} parent=5 // pred_fallthru
      _
  $region6: #{classifier_siamese_forward.1} parent=0 // loop_footer
    %s16 = sadd.s32 1, %s12
  $region7: #{classifier_siamese_forward.1} parent=0 // loop_footer_branch
    %11 = sbr.rel target = $region3
  $region8: #{classifier_siamese_forward.1} parent=0 // loop_exit
    _

</llo_original>
